<compile_context>
chip_gen: v6e
topology: v6e:2x2x1
jax: 0.10.0
libtpu: 0.0.40
codegen_flags: <defaults>
</compile_context>

<pallas_src>
import functools

import jax
import jax.numpy as jnp
from jax.experimental import pallas as pl
from jax.experimental.pallas import tpu as pltpu

K = 1    # latent dim (module hard-codes self.K = 1)
H = 16   # hidden width of both MLPs

_LANES = 128
_MAX_TN = 65536            # hard tile cap (keeps [16, TN] f32 intermediates well inside VMEM)
_DEFAULT_TN_CAP = 32768    # auto-tile cap
_VMEM_LIMIT = 48 * 1024 * 1024   # < v7x's 64 MiB physical, ample for TN <= 64K on v5e/v6e too


def vae_kernel(x_ref, eps_ref, mats_ref, heads_ref, vecs_ref, out_ref):
    # Batch-on-lanes layout: every activation is [features, TN].
    x = x_ref[...]                # [1, TN]
    eps = eps_ref[...]            # [1, TN]

    vecs = vecs_ref[...]          # [H, 7] resident vector/bias pack
    w1c = vecs[:, 0:1]            # encoder Linear(1,16) weight as a column  [H, 1]
    w4c = vecs[:, 1:2]            # decoder Linear(1,16) weight
    b1c = vecs[:, 2:3]
    b2c = vecs[:, 3:4]
    b4c = vecs[:, 4:5]
    b5c = vecs[:, 5:6]
    b3c = vecs[0:2, 6:7]          # [2, 1] = (b3_mu, b3_logvar)
    b6s = vecs[2:3, 6:7]          # [1, 1]

    w2 = mats_ref[0]              # [H, H] (PyTorch [out, in] layout)
    w5 = mats_ref[1]              # [H, H]
    heads = heads_ref[...]        # [3, H]: rows 0-1 = w3 (Linear(16, 2K)), row 2 = w6 (Linear(16,1))
    w3 = heads[0:2, :]            # [2, H]
    w6 = heads[2:3, :]            # [1, H]

    # --- encoder: Linear(1,16) -> ReLU -> Linear(16,16) -> ReLU -> Linear(16, 2K)
    # K=1 input contraction as a VPU broadcast (no degenerate MXU matmul).
    h = jnp.maximum(w1c * x + b1c, 0.0)                                              # [H, TN]
    h = jnp.maximum(jnp.dot(w2, h, preferred_element_type=jnp.float32) + b2c, 0.0)   # [H, TN]
    enc = jnp.dot(w3, h, preferred_element_type=jnp.float32) + b3c                   # [2, TN] (MXU head)
    mu = enc[0:1, :]                                                                 # [1, TN]
    log_var = enc[1:2, :]                                                            # [1, TN]

    # --- reparameterization: z = mu + eps * exp(0.5 * log_var)
    z = mu + eps * jnp.exp(0.5 * log_var)                                            # [1, TN]

    # --- decoder: Linear(K,16) -> ReLU -> Linear(16,16) -> ReLU -> Linear(16,1)
    d = jnp.maximum(w4c * z + b4c, 0.0)                                              # [H, TN]
    d = jnp.maximum(jnp.dot(w5, d, preferred_element_type=jnp.float32) + b5c, 0.0)   # [H, TN]
    dec = jnp.dot(w6, d, preferred_element_type=jnp.float32) + b6s                   # [1, TN] (MXU head)

    # Lane-dense direct row stores into the packed (dec, mu, log_var) slab (no sublane concat).
    out_ref[0:1, :] = dec
    out_ref[1:3, :] = enc


def pack_params(params):
    """Pack 12 PyTorch-layout (W[out,in], b[out]) arrays into 3 small resident VMEM arrays."""
    (w1, b1, w2, b2, w3, b3, w4, b4, w5, b5, w6, b6) = params
    assert K == 1 and w3.shape == (2 * K, H) and b3.shape == (2 * K,), \
        "pack_params assumes K == 1 (output slab & scalar packing would silently break otherwise)"

    mats = jnp.stack([w2, w5], axis=0).astype(jnp.float32)                 # [2, H, H]
    heads = jnp.concatenate([w3, w6], axis=0).astype(jnp.float32)          # [3, H] = (w3_mu, w3_lv, w6)

    def col(v):
        v = jnp.ravel(v).astype(jnp.float32)
        return jnp.pad(v, (0, H - v.shape[0]))

    scalars = col(jnp.concatenate([jnp.ravel(b3), jnp.ravel(b6)]))         # [b3_mu, b3_lv, b6, 0..]
    vecs = jnp.stack(
        [col(w1), col(w4), col(b1), col(b2), col(b4), col(b5), scalars],
        axis=1)                                                            # [H, 7]
    return mats, heads, vecs


def _choose_tile(n, tn):
    """Pick a lane-aligned batch tile: big enough to amortize ~0.35us/step grid overhead,
    small enough for >=2-4 grid steps (v7x megacore sharding) and comfortable VMEM."""
    if tn is None:
        target = pl.cdiv(pl.cdiv(n, 4), _LANES) * _LANES
        tn = max(_LANES, min(_DEFAULT_TN_CAP, target))
    return max(_LANES, min(_MAX_TN, (int(tn) // _LANES) * _LANES))


@functools.partial(jax.jit, static_argnames=("tn",))
def vae_forward(x, eps, params, *, tn=None):
    """x: [N, 1] f32, eps: [N, K] f32, params: PyTorch-layout (W[out,in], b[out]) tuple.

    tn (optional) is the batch tile in lanes; by default ~N/4 capped at 32K. All math is f32
    (v5e-safe; a bf16 activation variant would be ~1.5-2x on v6e/v7x but changes numerics).
    """
    n = x.shape[0]
    tn = _choose_tile(n, tn)
    n_pad = pl.cdiv(n, tn) * tn

    # [N,1] -> [1,N] is a free bitcast; x and eps stay as two separate streams (no concat copy).
    x2 = x.reshape(1, n).astype(jnp.float32)
    e2 = eps.reshape(1, n).astype(jnp.float32)
    if n_pad != n:
        pad = ((0, 0), (0, n_pad - n))
        x2 = jnp.pad(x2, pad)
        e2 = jnp.pad(e2, pad)
    mats, heads, vecs = pack_params(params)

    out = pl.pallas_call(
        vae_kernel,
        out_shape=jax.ShapeDtypeStruct((3, n_pad), jnp.float32),
        grid=(n_pad // tn,),
        in_specs=[
            pl.BlockSpec((1, tn), lambda i: (0, i)),        # x tile, pipelined over batch
            pl.BlockSpec((1, tn), lambda i: (0, i)),        # eps tile
            pl.BlockSpec((2, H, H), lambda i: (0, 0, 0)),   # resident 16x16 weights (w2, w5)
            pl.BlockSpec((3, H), lambda i: (0, 0)),         # resident head rows (w3, w6)
            pl.BlockSpec((H, 7), lambda i: (0, 0)),         # resident vector/bias pack
        ],
        out_specs=pl.BlockSpec((3, tn), lambda i: (0, i)),  # packed (dec, mu, logvar) slab
        compiler_params=pltpu.CompilerParams(
            dimension_semantics=("parallel",),              # megacore-shardable batch axis
            vmem_limit_bytes=_VMEM_LIMIT),                  # large tiles fit even v5e's 16 MiB default
    )(x2, e2, mats, heads, vecs)

    # Single slice + single transpose; column slices below fuse under jit.
    packed = out[:, :n].T                                   # [n, 3] = (dec, mu, log_var)
    dec = packed[:, 0:1]
    mu = packed[:, 1:2]
    log_var = packed[:, 2:3]
    return dec, mu, log_var


def init_linear(key, fan_in, fan_out):
    """Deterministic PyTorch-style Linear init; returns (W [out,in], b [out])."""
    kw, kb = jax.random.split(key)
    bound = 1.0 / jnp.sqrt(jnp.float32(fan_in))
    w = jax.random.uniform(kw, (fan_out, fan_in), jnp.float32, -bound, bound)
    b = jax.random.uniform(kb, (fan_out,), jnp.float32, -bound, bound)
    return w, b


def init_params(key):
    ks = jax.random.split(key, 6)
    w1, b1 = init_linear(ks[0], 1, 16)        # encoder Linear(1, 16)
    w2, b2 = init_linear(ks[1], 16, 16)       # encoder Linear(16, 16)
    w3, b3 = init_linear(ks[2], 16, 2 * K)    # encoder Linear(16, 2K)
    w4, b4 = init_linear(ks[3], K, 16)        # decoder Linear(K, 16)
    w5, b5 = init_linear(ks[4], 16, 16)       # decoder Linear(16, 16)
    w6, b6 = init_linear(ks[5], 16, 1)        # decoder Linear(16, 1)
    return (w1, b1, w2, b2, w3, b3, w4, b4, w5, b5, w6, b6)


def vae_reference(x, eps, params):
    """Pure-JAX reference in standard [N, F] layout with PyTorch-layout weights."""
    (w1, b1, w2, b2, w3, b3, w4, b4, w5, b5, w6, b6) = params
    h = jnp.maximum(x @ w1.T + b1, 0.0)
    h = jnp.maximum(h @ w2.T + b2, 0.0)
    enc = h @ w3.T + b3
    mu, log_var = enc[:, 0:K], enc[:, K:2 * K]
    z = mu + eps * jnp.exp(0.5 * log_var)
    d = jnp.maximum(z @ w4.T + b4, 0.0)
    d = jnp.maximum(d @ w5.T + b5, 0.0)
    dec = d @ w6.T + b6
    return dec, mu, log_var


if __name__ == "__main__":
    key = jax.random.PRNGKey(0)
    k_x, k_eps, k_p = jax.random.split(key, 3)

    N = 1024
    x = jax.random.normal(k_x, (N, 1), jnp.float32)
    # TODO(synk): torch.randn_like(std) has no in-kernel equivalent here; eps is sampled in the
    # JAX wrapper and passed in (same reparameterization math).
    eps = jax.random.normal(k_eps, (N, K), jnp.float32)
    params = init_params(k_p)

    dec, mu, log_var = vae_forward(x, eps, params)   # auto tile -> 256 lanes, 4 grid steps
    jax.block_until_ready((dec, mu, log_var))

    dec_r, mu_r, lv_r = vae_reference(x, eps, params)
    assert jnp.allclose(dec, dec_r, atol=1e-4), "dec mismatch"
    assert jnp.allclose(mu, mu_r, atol=1e-4), "mu mismatch"
    assert jnp.allclose(log_var, lv_r, atol=1e-4), "log_var mismatch"

    print("KERNEL_OK")
</pallas_src>

<mosaic_0001>
module attributes {stable_mosaic.version = 11 : i64} {
  func.func @vae_kernel(%arg0: i32, %arg1: memref<1x256xf32, #tpu.memory_space<vmem>>, %arg2: memref<1x256xf32, #tpu.memory_space<vmem>>, %arg3: memref<2x16x16xf32, #tpu.memory_space<vmem>>, %arg4: memref<3x16xf32, #tpu.memory_space<vmem>>, %arg5: memref<16x7xf32, #tpu.memory_space<vmem>>, %arg6: memref<3x256xf32, #tpu.memory_space<vmem>>) attributes {dimension_semantics = [#tpu.dimension_semantics<parallel>], iteration_bounds = array<i64: 4>, scalar_prefetch = 0 : i64, scratch_operands = 0 : i64, tpu.core_type = #tpu.core_type<tc>, window_params = [{transform_indices = @transform_0, window_bounds = array<i64: 1, 256>}, {transform_indices = @transform_1, window_bounds = array<i64: 1, 256>}, {pipeline_mode = #tpu.pipeline_mode<synchronous>, transform_indices = @transform_2, window_bounds = array<i64: 2, 16, 16>}, {pipeline_mode = #tpu.pipeline_mode<synchronous>, transform_indices = @transform_3, window_bounds = array<i64: 3, 16>}, {pipeline_mode = #tpu.pipeline_mode<synchronous>, transform_indices = @transform_4, window_bounds = array<i64: 16, 7>}, {transform_indices = @transform_5, window_bounds = array<i64: 3, 256>}]} {
    %c0 = arith.constant 0 : index
    %c0_0 = arith.constant 0 : index
    %0 = vector.load %arg1[%c0, %c0_0] : memref<1x256xf32, #tpu.memory_space<vmem>>, vector<1x256xf32>
    %c0_1 = arith.constant 0 : index
    %c0_2 = arith.constant 0 : index
    %1 = vector.load %arg2[%c0_1, %c0_2] : memref<1x256xf32, #tpu.memory_space<vmem>>, vector<1x256xf32>
    %c0_3 = arith.constant 0 : index
    %c0_4 = arith.constant 0 : index
    %2 = vector.load %arg5[%c0_3, %c0_4] : memref<16x7xf32, #tpu.memory_space<vmem>>, vector<16x7xf32>
    %3 = vector.extract_strided_slice %2 {offsets = [0, 0], sizes = [16, 1], strides = [1, 1]} : vector<16x7xf32> to vector<16x1xf32>
    %4 = vector.extract_strided_slice %2 {offsets = [0, 1], sizes = [16, 1], strides = [1, 1]} : vector<16x7xf32> to vector<16x1xf32>
    %5 = vector.extract_strided_slice %2 {offsets = [0, 2], sizes = [16, 1], strides = [1, 1]} : vector<16x7xf32> to vector<16x1xf32>
    %6 = vector.extract_strided_slice %2 {offsets = [0, 3], sizes = [16, 1], strides = [1, 1]} : vector<16x7xf32> to vector<16x1xf32>
    %7 = vector.extract_strided_slice %2 {offsets = [0, 4], sizes = [16, 1], strides = [1, 1]} : vector<16x7xf32> to vector<16x1xf32>
    %8 = vector.extract_strided_slice %2 {offsets = [0, 5], sizes = [16, 1], strides = [1, 1]} : vector<16x7xf32> to vector<16x1xf32>
    %9 = vector.extract_strided_slice %2 {offsets = [0, 6], sizes = [2, 1], strides = [1, 1]} : vector<16x7xf32> to vector<2x1xf32>
    %10 = vector.extract_strided_slice %2 {offsets = [2, 6], sizes = [1, 1], strides = [1, 1]} : vector<16x7xf32> to vector<1x1xf32>
    %c0_5 = arith.constant 0 : index
    %c0_6 = arith.constant 0 : index
    %c0_7 = arith.constant 0 : index
    %11 = vector.load %arg3[%c0_5, %c0_6, %c0_7] : memref<2x16x16xf32, #tpu.memory_space<vmem>>, vector<1x16x16xf32>
    %12 = vector.shape_cast %11 : vector<1x16x16xf32> to vector<16x16xf32>
    %c1 = arith.constant 1 : index
    %c0_8 = arith.constant 0 : index
    %c0_9 = arith.constant 0 : index
    %13 = vector.load %arg3[%c1, %c0_8, %c0_9] : memref<2x16x16xf32, #tpu.memory_space<vmem>>, vector<1x16x16xf32>
    %14 = vector.shape_cast %13 : vector<1x16x16xf32> to vector<16x16xf32>
    %c0_10 = arith.constant 0 : index
    %c0_11 = arith.constant 0 : index
    %15 = vector.load %arg4[%c0_10, %c0_11] : memref<3x16xf32, #tpu.memory_space<vmem>>, vector<3x16xf32>
    %16 = vector.extract_strided_slice %15 {offsets = [0, 0], sizes = [2, 16], strides = [1, 1]} : vector<3x16xf32> to vector<2x16xf32>
    %17 = vector.extract_strided_slice %15 {offsets = [2, 0], sizes = [1, 16], strides = [1, 1]} : vector<3x16xf32> to vector<1x16xf32>
    %18 = vector.broadcast %3 : vector<16x1xf32> to vector<16x256xf32>
    %19 = vector.broadcast %0 : vector<1x256xf32> to vector<16x256xf32>
    %20 = arith.mulf %18, %19 : vector<16x256xf32>
    %21 = vector.broadcast %5 : vector<16x1xf32> to vector<16x256xf32>
    %22 = arith.addf %20, %21 : vector<16x256xf32>
    %cst = arith.constant 0.000000e+00 : f32
    %23 = vector.broadcast %cst : f32 to vector<16x256xf32>
    %24 = arith.maximumf %22, %23 : vector<16x256xf32>
    %cst_12 = arith.constant dense<0.000000e+00> : vector<16x256xf32>
    %25 = tpu.matmul %12, %24, %cst_12 {dimension_numbers = #tpu.dot_dimension_numbers<[1], [0], [0], [1], [0, 0, 1, 1], [], []>} : vector<16x16xf32>, vector<16x256xf32>, vector<16x256xf32> -> vector<16x256xf32>
    %26 = vector.broadcast %6 : vector<16x1xf32> to vector<16x256xf32>
    %27 = arith.addf %25, %26 : vector<16x256xf32>
    %cst_13 = arith.constant 0.000000e+00 : f32
    %28 = vector.broadcast %cst_13 : f32 to vector<16x256xf32>
    %29 = arith.maximumf %27, %28 : vector<16x256xf32>
    %cst_14 = arith.constant dense<0.000000e+00> : vector<2x256xf32>
    %30 = tpu.matmul %16, %29, %cst_14 {dimension_numbers = #tpu.dot_dimension_numbers<[1], [0], [0], [1], [0, 0, 1, 1], [], []>} : vector<2x16xf32>, vector<16x256xf32>, vector<2x256xf32> -> vector<2x256xf32>
    %31 = vector.broadcast %9 : vector<2x1xf32> to vector<2x256xf32>
    %32 = arith.addf %30, %31 : vector<2x256xf32>
    %33 = vector.extract_strided_slice %32 {offsets = [0, 0], sizes = [1, 256], strides = [1, 1]} : vector<2x256xf32> to vector<1x256xf32>
    %34 = vector.extract_strided_slice %32 {offsets = [1, 0], sizes = [1, 256], strides = [1, 1]} : vector<2x256xf32> to vector<1x256xf32>
    %cst_15 = arith.constant 5.000000e-01 : f32
    %35 = vector.broadcast %cst_15 : f32 to vector<1x256xf32>
    %36 = arith.mulf %35, %34 : vector<1x256xf32>
    %37 = math.exp %36 : vector<1x256xf32>
    %38 = arith.mulf %1, %37 : vector<1x256xf32>
    %39 = arith.addf %33, %38 : vector<1x256xf32>
    %40 = vector.broadcast %4 : vector<16x1xf32> to vector<16x256xf32>
    %41 = vector.broadcast %39 : vector<1x256xf32> to vector<16x256xf32>
    %42 = arith.mulf %40, %41 : vector<16x256xf32>
    %43 = vector.broadcast %7 : vector<16x1xf32> to vector<16x256xf32>
    %44 = arith.addf %42, %43 : vector<16x256xf32>
    %cst_16 = arith.constant 0.000000e+00 : f32
    %45 = vector.broadcast %cst_16 : f32 to vector<16x256xf32>
    %46 = arith.maximumf %44, %45 : vector<16x256xf32>
    %cst_17 = arith.constant dense<0.000000e+00> : vector<16x256xf32>
    %47 = tpu.matmul %14, %46, %cst_17 {dimension_numbers = #tpu.dot_dimension_numbers<[1], [0], [0], [1], [0, 0, 1, 1], [], []>} : vector<16x16xf32>, vector<16x256xf32>, vector<16x256xf32> -> vector<16x256xf32>
    %48 = vector.broadcast %8 : vector<16x1xf32> to vector<16x256xf32>
    %49 = arith.addf %47, %48 : vector<16x256xf32>
    %cst_18 = arith.constant 0.000000e+00 : f32
    %50 = vector.broadcast %cst_18 : f32 to vector<16x256xf32>
    %51 = arith.maximumf %49, %50 : vector<16x256xf32>
    %cst_19 = arith.constant dense<0.000000e+00> : vector<1x256xf32>
    %52 = tpu.matmul %17, %51, %cst_19 {dimension_numbers = #tpu.dot_dimension_numbers<[1], [0], [0], [1], [0, 0, 1, 1], [], []>} : vector<1x16xf32>, vector<16x256xf32>, vector<1x256xf32> -> vector<1x256xf32>
    %53 = vector.broadcast %10 : vector<1x1xf32> to vector<1x256xf32>
    %54 = arith.addf %52, %53 : vector<1x256xf32>
    %c0_20 = arith.constant 0 : index
    %c0_21 = arith.constant 0 : index
    %55 = vector.load %arg6[%c0_20, %c0_21] : memref<3x256xf32, #tpu.memory_space<vmem>>, vector<1x256xf32>
    tpu.vector_store %arg6[%c0_20, %c0_21], %54 {strides = array<i32>} : memref<3x256xf32, #tpu.memory_space<vmem>>, vector<1x256xf32>,
    %c1_22 = arith.constant 1 : index
    %c0_23 = arith.constant 0 : index
    %56 = vector.load %arg6[%c1_22, %c0_23] : memref<3x256xf32, #tpu.memory_space<vmem>>, vector<2x256xf32>
    tpu.vector_store %arg6[%c1_22, %c0_23], %32 {strides = array<i32>} : memref<3x256xf32, #tpu.memory_space<vmem>>, vector<2x256xf32>,
    return
  }
  func.func @transform_0(%arg0: i32) -> (i32, i32) {
    %c0_i32 = arith.constant 0 : i32
    %c0_i32_0 = arith.constant 0 : i32
    return %c0_i32, %arg0 : i32, i32
  }
  func.func @transform_1(%arg0: i32) -> (i32, i32) {
    %c0_i32 = arith.constant 0 : i32
    %c0_i32_0 = arith.constant 0 : i32
    return %c0_i32, %arg0 : i32, i32
  }
  func.func @transform_2(%arg0: i32) -> (i32, i32, i32) {
    %c0_i32 = arith.constant 0 : i32
    %c0_i32_0 = arith.constant 0 : i32
    %c0_i32_1 = arith.constant 0 : i32
    %c0_i32_2 = arith.constant 0 : i32
    return %c0_i32, %c0_i32_0, %c0_i32_1 : i32, i32, i32
  }
  func.func @transform_3(%arg0: i32) -> (i32, i32) {
    %c0_i32 = arith.constant 0 : i32
    %c0_i32_0 = arith.constant 0 : i32
    %c0_i32_1 = arith.constant 0 : i32
    return %c0_i32, %c0_i32_0 : i32, i32
  }
  func.func @transform_4(%arg0: i32) -> (i32, i32) {
    %c0_i32 = arith.constant 0 : i32
    %c0_i32_0 = arith.constant 0 : i32
    %c0_i32_1 = arith.constant 0 : i32
    return %c0_i32, %c0_i32_0 : i32, i32
  }
  func.func @transform_5(%arg0: i32) -> (i32, i32) {
    %c0_i32 = arith.constant 0 : i32
    %c0_i32_0 = arith.constant 0 : i32
    return %c0_i32, %arg0 : i32, i32
  }
}

</mosaic_0001>

<llo_original>
// kernel: vae_forward.1
$region0: #{vae_forward.1}
  #allocation0 [shape = 'u32[]', space=smem, size = 0x4, offset = 0x4, fixed_abs, tag = 'smem constant byte address 0x4 - core index']
  #allocation1 [shape = 'u32[144,128]{1,0:T(1,128)}', space=vmem, size = 0x12000, scoped, tag = 'internal scratch']
  %s0 = inlined_call_operand.vmem [shape: f32[1,1024], index: 0, kind: input, shape index: {}]
  %s1 = inlined_call_operand.vmem [shape: f32[1,1024], index: 1, kind: input, shape index: {}]
  %s2 = inlined_call_operand.vmem [shape: f32[2,16,16], index: 2, kind: input, shape index: {}]
  %s3 = inlined_call_operand.vmem [shape: f32[3,16], index: 3, kind: input, shape index: {}]
  %s4 = inlined_call_operand.vmem [shape: f32[16,7], index: 4, kind: input, shape index: {}]
  %s5 = inlined_call_operand.vmem [shape: f32[3,1024], index: 5, kind: output, shape index: {}]
  %s6 = sld [smem:[#allocation0]]
  $region53: #{vae_forward.1} parent=0
    _
  %s8 = ssub.s32 1, %s6
  %s9 = scalar_select 0, %s8, %s6
  loop: start=0, step=1, limit=6
  $region2: #{vae_forward.1} parent=0 // loop_pre_header
    _
  $region3: #{vae_forward.1} parent=0 // loop_header
    %s11 = sphi 0, %s15
    %p12 = scmp.ge.s32.totalorder %s11, 6
    %s21 = sphi 0, %s23
    %s24 = sphi 0, %s21
    %s25 = sphi 0, %s24
    %s41 = sphi 0, %s25
    %s47 = sphi 0, %s49
    %s50 = sphi 0, %s47
    %s51 = sphi 0, %s50
    %s67 = sphi 0, %s51
    %s71 = sphi 0, %s71
    %s73 = sphi 0, %s71
    %s74 = sphi 0, %s73
    %s88 = sphi 0, %s74
    %s92 = sphi 0, %s92
    %s94 = sphi 0, %s92
    %s95 = sphi 0, %s94
    %s109 = sphi 0, %s95
    %s113 = sphi 0, %s113
    %s115 = sphi 0, %s113
    %s116 = sphi 0, %s115
    %s130 = sphi 0, %s116
    %s136 = sphi 0, %s138
    %s139 = sphi 0, %s136
    %s140 = sphi 0, %s139
    %s156 = sphi 0, %s140
  $region4: #{vae_forward.1} parent=0 // loop_header_branch
    %14 = sbr.rel (%p12) target = $region8
  $region5: #{vae_forward.1} parent=0 // loop_body
    %s16 = ssub.s32 %s11, 1
    %s17 = ssub.s32 %s11, 2
    %s18 = sadd.s32 %s11, 1
    %s19 = ssub.s32 %s11, %s18
    %p20 = scmp.eq.s32.totalorder %s19, 0
    %s22 = sadd.s32 %s21, 1
    %s23 = scalar_select %p20, %s21, %s22
    %p26 = pneg %p20
    %p27 = scmp.eq.s32.totalorder %s11, 3
    %p28 = por %p26, %p27
    %p29 = scmp.ne.s32.totalorder %s21, %s24
    %p30 = scmp.eq.s32.totalorder %s11, 0
    %p31 = por %p29, %p30
    %p32 = scmp.ne.s32.totalorder %s21, %s24
    %p33 = scmp.eq.s32.totalorder %s16, 3
    %p34 = por %p32, %p33
    %p35 = scmp.ne.s32.totalorder %s24, %s25
    %p36 = scmp.eq.s32.totalorder %s16, 0
    %p37 = por %p35, %p36
    %p38 = scmp.ne.s32.totalorder %s24, %s25
    %p39 = scmp.eq.s32.totalorder %s17, 3
    %p40 = por %p38, %p39
    %p42 = scmp.ne.s32.totalorder %s25, %s41
    %p43 = scmp.eq.s32.totalorder %s17, 0
    %p44 = por %p42, %p43
    %s45 = ssub.s32 %s11, %s18
    %p46 = scmp.eq.s32.totalorder %s45, 0
    %s48 = sadd.s32 %s47, 1
    %s49 = scalar_select %p46, %s47, %s48
    %p52 = pneg %p46
    %p53 = scmp.eq.s32.totalorder %s11, 3
    %p54 = por %p52, %p53
    %p55 = scmp.ne.s32.totalorder %s47, %s50
    %p56 = scmp.eq.s32.totalorder %s11, 0
    %p57 = por %p55, %p56
    %p58 = scmp.ne.s32.totalorder %s47, %s50
    %p59 = scmp.eq.s32.totalorder %s16, 3
    %p60 = por %p58, %p59
    %p61 = scmp.ne.s32.totalorder %s50, %s51
    %p62 = scmp.eq.s32.totalorder %s16, 0
    %p63 = por %p61, %p62
    %p64 = scmp.ne.s32.totalorder %s50, %s51
    %p65 = scmp.eq.s32.totalorder %s17, 3
    %p66 = por %p64, %p65
    %p68 = scmp.ne.s32.totalorder %s51, %s67
    %p69 = scmp.eq.s32.totalorder %s17, 0
    %p70 = por %p68, %p69
    %s72 = sadd.s32 %s71, 1
    %p75 = scmp.eq.s32.totalorder %s11, 3
    %p76 = scmp.ne.s32.totalorder %s71, %s73
    %p77 = scmp.eq.s32.totalorder %s11, 0
    %p78 = por %p76, %p77
    %p79 = scmp.ne.s32.totalorder %s71, %s73
    %p80 = scmp.eq.s32.totalorder %s16, 3
    %p81 = por %p79, %p80
    %p82 = scmp.ne.s32.totalorder %s73, %s74
    %p83 = scmp.eq.s32.totalorder %s16, 0
    %p84 = por %p82, %p83
    %p85 = scmp.ne.s32.totalorder %s73, %s74
    %p86 = scmp.eq.s32.totalorder %s17, 3
    %p87 = por %p85, %p86
    %p89 = scmp.ne.s32.totalorder %s74, %s88
    %p90 = scmp.eq.s32.totalorder %s17, 0
    %p91 = por %p89, %p90
    %s93 = sadd.s32 %s92, 1
    %p96 = scmp.eq.s32.totalorder %s11, 3
    %p97 = scmp.ne.s32.totalorder %s92, %s94
    %p98 = scmp.eq.s32.totalorder %s11, 0
    %p99 = por %p97, %p98
    %p100 = scmp.ne.s32.totalorder %s92, %s94
    %p101 = scmp.eq.s32.totalorder %s16, 3
    %p102 = por %p100, %p101
    %p103 = scmp.ne.s32.totalorder %s94, %s95
    %p104 = scmp.eq.s32.totalorder %s16, 0
    %p105 = por %p103, %p104
    %p106 = scmp.ne.s32.totalorder %s94, %s95
    %p107 = scmp.eq.s32.totalorder %s17, 3
    %p108 = por %p106, %p107
    %p110 = scmp.ne.s32.totalorder %s95, %s109
    %p111 = scmp.eq.s32.totalorder %s17, 0
    %p112 = por %p110, %p111
    %s114 = sadd.s32 %s113, 1
    %p117 = scmp.eq.s32.totalorder %s11, 3
    %p118 = scmp.ne.s32.totalorder %s113, %s115
    %p119 = scmp.eq.s32.totalorder %s11, 0
    %p120 = por %p118, %p119
    %p121 = scmp.ne.s32.totalorder %s113, %s115
    %p122 = scmp.eq.s32.totalorder %s16, 3
    %p123 = por %p121, %p122
    %p124 = scmp.ne.s32.totalorder %s115, %s116
    %p125 = scmp.eq.s32.totalorder %s16, 0
    %p126 = por %p124, %p125
    %p127 = scmp.ne.s32.totalorder %s115, %s116
    %p128 = scmp.eq.s32.totalorder %s17, 3
    %p129 = por %p127, %p128
    %p131 = scmp.ne.s32.totalorder %s116, %s130
    %p132 = scmp.eq.s32.totalorder %s17, 0
    %p133 = por %p131, %p132
    %s134 = ssub.s32 %s11, %s18
    %p135 = scmp.eq.s32.totalorder %s134, 0
    %s137 = sadd.s32 %s136, 1
    %s138 = scalar_select %p135, %s136, %s137
    %p141 = pneg %p135
    %p142 = scmp.eq.s32.totalorder %s11, 3
    %p143 = por %p141, %p142
    %p144 = scmp.ne.s32.totalorder %s136, %s139
    %p145 = scmp.eq.s32.totalorder %s11, 0
    %p146 = por %p144, %p145
    %p147 = scmp.ne.s32.totalorder %s136, %s139
    %p148 = scmp.eq.s32.totalorder %s16, 3
    %p149 = por %p147, %p148
    %p150 = scmp.ne.s32.totalorder %s139, %s140
    %p151 = scmp.eq.s32.totalorder %s16, 0
    %p152 = por %p150, %p151
    %p153 = scmp.ne.s32.totalorder %s139, %s140
    %p154 = scmp.eq.s32.totalorder %s17, 3
    %p155 = por %p153, %p154
    %p157 = scmp.ne.s32.totalorder %s140, %s156
    %p158 = scmp.eq.s32.totalorder %s17, 0
    %p159 = por %p157, %p158
    %p160 = scmp.le.s32.totalorder 1, %s11
    %p161 = scmp.lt.s32.totalorder %s11, 5
    %p162 = pnand %p160, %p161
    %p163 = pneg %p162
    // Predicated region
    $region9: #{vae_forward.1} parent=5 // pred_check
      _
    $region10: #{vae_forward.1} parent=5 // pred_check_branch
      %165 = sbr.rel (%p162) target = $region12
    $region11: #{vae_forward.1} parent=5 // pred_region
      %s166 = ssub.s32 %s11, 1
      // Predicated region
      $region13: #{vae_forward.1} parent=11 // pred_check
        %p167 = pneg %p84
      $region14: #{vae_forward.1} parent=11 // pred_check_branch
        %169 = sbr.rel (%p167) target = $region16
      $region15: #{vae_forward.1} parent=11 // pred_region
        _
      $region16: #{vae_forward.1} parent=11 // pred_fallthru
        _
      // Predicated region
      $region17: #{vae_forward.1} parent=11 // pred_check
        %p170 = pneg %p105
      $region18: #{vae_forward.1} parent=11 // pred_check_branch
        %172 = sbr.rel (%p170) target = $region20
      $region19: #{vae_forward.1} parent=11 // pred_region
        _
      $region20: #{vae_forward.1} parent=11 // pred_fallthru
        _
      // Predicated region
      $region21: #{vae_forward.1} parent=11 // pred_check
        %p173 = pneg %p126
      $region22: #{vae_forward.1} parent=11 // pred_check_branch
        %175 = sbr.rel (%p173) target = $region24
      $region23: #{vae_forward.1} parent=11 // pred_region
        _
      $region24: #{vae_forward.1} parent=11 // pred_fallthru
        _
    $region12: #{vae_forward.1} parent=5 // pred_fallthru
      _
    %p176 = scmp.lt.s32.totalorder %s11, 4
    // Predicated region
    $region25: #{vae_forward.1} parent=5 // pred_check
      %p177 = pneg %p176
    $region26: #{vae_forward.1} parent=5 // pred_check_branch
      %179 = sbr.rel (%p177) target = $region28
    $region27: #{vae_forward.1} parent=5 // pred_region
      // Predicated region
      $region29: #{vae_forward.1} parent=27 // pred_check
        %p180 = pneg %p31
      $region30: #{vae_forward.1} parent=27 // pred_check_branch
        %182 = sbr.rel (%p180) target = $region32
      $region31: #{vae_forward.1} parent=27 // pred_region
        %s183 = smul.u32 2, %s11
        %p184 = scmp.lt.s32.totalorder %s183, 7
        %s185 = scalar_select %p184, %s183, 7
        %s186 = scalar_lea.vmem %s0, %s185
        %s187 = smul.u32 2, %s11
      $region32: #{vae_forward.1} parent=27 // pred_fallthru
        _
      // Predicated region
      $region33: #{vae_forward.1} parent=27 // pred_check
        %p188 = pneg %p57
      $region34: #{vae_forward.1} parent=27 // pred_check_branch
        %190 = sbr.rel (%p188) target = $region36
      $region35: #{vae_forward.1} parent=27 // pred_region
        %s191 = smul.u32 2, %s11
        %p192 = scmp.lt.s32.totalorder %s191, 7
        %s193 = scalar_select %p192, %s191, 7
        %s194 = scalar_lea.vmem %s1, %s193
        %s195 = smul.u32 2, %s11
      $region36: #{vae_forward.1} parent=27 // pred_fallthru
        _
    $region28: #{vae_forward.1} parent=5 // pred_fallthru
      _
    %p196 = scmp.le.s32.totalorder 1, %s11
    %p197 = scmp.lt.s32.totalorder %s11, 5
    %p198 = pnand %p196, %p197
    %p199 = pneg %p198
    // Predicated region
    $region37: #{vae_forward.1} parent=5 // pred_check
      _
    $region38: #{vae_forward.1} parent=5 // pred_check_branch
      %201 = sbr.rel (%p198) target = $region40
    $region39: #{vae_forward.1} parent=5 // pred_region
      %s202 = ssub.s32 %s11, 1
      %s203 = smul.u32 2, %s16
      %p204 = scmp.lt.s32.totalorder %s203, 7
      %s205 = scalar_select %p204, %s203, 7
      %s206 = scalar_lea.vmem %s0, %s205
      %p207 = pneg %p37
      %p208 = pneg %p34
      %s209 = smul.u32 2, %s16
      %p210 = scmp.lt.s32.totalorder %s209, 7
      %s211 = scalar_select %p210, %s209, 7
      %s212 = scalar_lea.vmem %s1, %s211
      %p213 = pneg %p63
      %p214 = pneg %p60
      %p215 = pneg %p84
      %p216 = pneg %p81
      %p217 = pneg %p105
      %p218 = pneg %p102
      %p219 = pneg %p126
      %p220 = pneg %p123
      %p221 = pneg %p152
      %p222 = pneg %p149
      %s223 = smul.u32 2, %s16
      %p224 = scmp.lt.s32.totalorder %s223, 7
      %s225 = scalar_select %p224, %s223, 7
      %s226 = smul.addr %s225, 4
      %s227 = scalar_lea.vmem %s5, %s226
      %s228 = smul.u32 2, %s16
      %p229 = scmp.lt.s32.totalorder %s228, 7
      %s230 = scalar_select %p229, %s228, 7
      %s231 = scalar_lea.vmem %s0, %s230
      %s232 = smul.u32 2, %s16
      %s233 = smul.u32 2, %s16
      %p234 = scmp.lt.s32.totalorder %s233, 7
      %s235 = scalar_select %p234, %s233, 7
      %s236 = scalar_lea.vmem %s1, %s235
      %s237 = smul.u32 2, %s16
      %s238 = smul.u32 2, %s16
      %p239 = scmp.lt.s32.totalorder %s238, 7
      %s240 = scalar_select %p239, %s238, 7
      %s241 = smul.addr %s240, 4
      %s242 = scalar_lea.vmem %s5, %s241
      %s243 = smul.u32 2, %s16
      %v244 = vld [vmem:[%s231] sm:$0x3]
      %v245 = vld [vmem:[%s236] sm:$0x3]
      %v246 = vld [vmem:[%s4] sm:$0xff]
      %v247 = vld [vmem:[%s4 + $0x8] sm:$0xff]
      %v248 = vld [vmem:[%s2] sm:$0xff]
      %v249 = vld [vmem:[%s2 + $0x8] sm:$0xff]
      %s250 = scalar_lea.vmem %s2, 16
      %v251 = vld [vmem:[%s250] sm:$0xff]
      %v252 = vld [vmem:[%s250 + $0x8] sm:$0xff]
      %v253 = vld [vmem:[%s3] sm:$0x7]
      %255 = vset.pattern.permute.xlu0 0
      %256 = vperm.xlu0 %255, %v246
      %v257 = vpop.permute.xlu0 %256
      %260 = vset.pattern.permute.xlu0 0
      %261 = vperm.xlu0 %260, %v247
      %v262 = vpop.permute.xlu0 %261
      %v265 = vlaneseq
      %v266 = vshrl.u32 %v265, 7
      %v267 = vsub.s32 0, %v266
      %v268 = vrot.slane %v244, %v267
      %v269 = vlaneseq
      %v270 = vshrl.u32 %v269, 7
      %v271 = vsub.s32 1, %v270
      %v272 = vrot.slane %v244, %v271
      %v275 = vmul.f32 %v257, %v268
      %v276 = vmul.f32 %v257, %v272
      %v277 = vmul.f32 %v262, %v268
      %v278 = vmul.f32 %v262, %v272
      %279 = vset.pattern.permute.xlu0 2
      %280 = vperm.xlu0 %279, %v246
      %v281 = vpop.permute.xlu0 %280
      %283 = vset.pattern.permute.xlu0 2
      %284 = vperm.xlu0 %283, %v247
      %v285 = vpop.permute.xlu0 %284
      %v287 = vadd.f32 %v275, %v281
      %v288 = vadd.f32 %v276, %v281
      %v289 = vadd.f32 %v277, %v285
      %v290 = vadd.f32 %v278, %v285
      %v291 = vmax.f32 %v287, 0.0
      %v292 = vmax.f32 %v288, 0.0
      %v293 = vmax.f32 %v289, 0.0
      %v294 = vmax.f32 %v290, 0.0
      %295 = vset.pattern.permute.xlu0 3
      %296 = vperm.xlu0 %295, %v246
      %v297 = vpop.permute.xlu0 %296
      %299 = vset.pattern.permute.xlu0 3
      %300 = vperm.xlu0 %299, %v247
      %v301 = vpop.permute.xlu0 %300
      %vm303 = vcmask 130048
      %v305 = vsel %vm303, %v248, 0
      %v308 = vsel %vm303, %v249, 0
      %310 = vmatprep.subr.mxu0 0.0
      %311 = vmatpush1.msra.mxu0 0.0
      %312 = vmatprep.subr.mxu0 0.0
      %313 = vmatpush1.msra.mxu0 0.0
      %314 = vmatprep.subr.mxu0 0.0
      %315 = vmatpush1.msra.mxu0 0.0
      %316 = vmatprep.subr.mxu0 0.0
      %317 = vmatpush1.msra.mxu0 0.0
      %318 = vmatprep.subr.mxu0 0.0
      %319 = vmatpush1.msra.mxu0 0.0
      %320 = vmatprep.subr.mxu0 0.0
      %321 = vmatpush1.msra.mxu0 0.0
      %322 = vmatprep.subr.mxu0 0.0
      %323 = vmatpush1.msra.mxu0 0.0
      %324 = vmatprep.subr.mxu0 0.0
      %325 = vmatpush1.msra.mxu0 0.0
      %326 = vmatprep.subr.mxu0 0.0
      %327 = vmatpush1.msra.mxu0 0.0
      %328 = vmatprep.subr.mxu0 0.0
      %329 = vmatpush1.msra.mxu0 0.0
      %330 = vmatprep.subr.mxu0 0.0
      %331 = vmatpush1.msra.mxu0 0.0
      %332 = vmatprep.subr.mxu0 0.0
      %333 = vmatpush1.msra.mxu0 0.0
      %334 = vmatprep.subr.mxu0 0.0
      %335 = vmatpush1.msra.mxu0 0.0
      %336 = vmatprep.subr.mxu0 0.0
      %337 = vmatpush1.msra.mxu0 0.0
      %338 = vmatprep.subr.mxu0 %v294
      %339 = vmatpush1.msra.mxu0 %v293
      %340 = vmatprep.subr.mxu0 %v292
      %341 = vmatpush1.msra.mxu0 %v291
      %342 = vmatprep.subr.mxu0 0.0
      %343 = vmatpush2.msra.mxu0 0.0
      %344 = vmatprep.subr.mxu0 0.0
      %345 = vmatpush2.msra.mxu0 0.0
      %346 = vmatprep.subr.mxu0 0.0
      %347 = vmatpush2.msra.mxu0 0.0
      %348 = vmatprep.subr.mxu0 0.0
      %349 = vmatpush2.msra.mxu0 0.0
      %350 = vmatprep.subr.mxu0 0.0
      %351 = vmatpush2.msra.mxu0 0.0
      %352 = vmatprep.subr.mxu0 0.0
      %353 = vmatpush2.msra.mxu0 0.0
      %354 = vmatprep.subr.mxu0 0.0
      %355 = vmatpush2.msra.mxu0 0.0
      %356 = vmatprep.subr.mxu0 0.0
      %357 = vmatpush2.msra.mxu0 0.0
      %358 = vmatprep.subr.mxu0 0.0
      %359 = vmatpush2.msra.mxu0 0.0
      %360 = vmatprep.subr.mxu0 0.0
      %361 = vmatpush2.msra.mxu0 0.0
      %362 = vmatprep.subr.mxu0 0.0
      %363 = vmatpush2.msra.mxu0 0.0
      %364 = vmatprep.subr.mxu0 0.0
      %365 = vmatpush2.msra.mxu0 0.0
      %366 = vmatprep.subr.mxu0 0.0
      %367 = vmatpush2.msra.mxu0 0.0
      %368 = vmatprep.subr.mxu0 0.0
      %369 = vmatpush2.msra.mxu0 0.0
      %370 = vmatprep.subr.mxu0 0.0
      %371 = vmatpush2.msra.mxu0 0.0
      %372 = vmatprep.subr.mxu0 0.0
      %373 = vmatpush2.msra.mxu0 0.0
      %374 = vmatprep.mubr.f32.mxu0 0.0
      %375 = vmatmul.mubr.f32.gmra.mxu0 %v305
      %v376 = vpop.f32.mrf.mxu0
      %v377 = vadd.f32 %v297, %v376
      %v378 = vpop.f32.mrf.mxu0
      %v379 = vadd.f32 %v297, %v378
      %380 = vmatprep.mubr.f32.mxu0 0.0
      %381 = vmatmul.mubr.f32.gmra.mxu0 %v308
      %v382 = vpop.f32.mrf.mxu0
      %v383 = vadd.f32 %v301, %v382
      %v384 = vpop.f32.mrf.mxu0
      %v385 = vadd.f32 %v301, %v384
      %386 = vdwg.mxu0
      %v387 = vmax.f32 %v377, 0.0
      %v388 = vmax.f32 %v379, 0.0
      %v389 = vmax.f32 %v383, 0.0
      %v390 = vmax.f32 %v385, 0.0
      %391 = vset.pattern.permute.xlu0 6
      %392 = vperm.xlu0 %391, %v246
      %v393 = vpop.permute.xlu0 %392
      %v396 = vsel %vm303, %v253, 0
      %398 = vmatprep.subr.mxu0 0.0
      %399 = vmatpush1.msra.mxu0 0.0
      %400 = vmatprep.subr.mxu0 0.0
      %401 = vmatpush1.msra.mxu0 0.0
      %402 = vmatprep.subr.mxu0 0.0
      %403 = vmatpush1.msra.mxu0 0.0
      %404 = vmatprep.subr.mxu0 0.0
      %405 = vmatpush1.msra.mxu0 0.0
      %406 = vmatprep.subr.mxu0 0.0
      %407 = vmatpush1.msra.mxu0 0.0
      %408 = vmatprep.subr.mxu0 0.0
      %409 = vmatpush1.msra.mxu0 0.0
      %410 = vmatprep.subr.mxu0 0.0
      %411 = vmatpush1.msra.mxu0 0.0
      %412 = vmatprep.subr.mxu0 0.0
      %413 = vmatpush1.msra.mxu0 0.0
      %414 = vmatprep.subr.mxu0 0.0
      %415 = vmatpush1.msra.mxu0 0.0
      %416 = vmatprep.subr.mxu0 0.0
      %417 = vmatpush1.msra.mxu0 0.0
      %418 = vmatprep.subr.mxu0 0.0
      %419 = vmatpush1.msra.mxu0 0.0
      %420 = vmatprep.subr.mxu0 0.0
      %421 = vmatpush1.msra.mxu0 0.0
      %422 = vmatprep.subr.mxu0 0.0
      %423 = vmatpush1.msra.mxu0 0.0
      %424 = vmatprep.subr.mxu0 0.0
      %425 = vmatpush1.msra.mxu0 0.0
      %426 = vmatprep.subr.mxu0 %v390
      %427 = vmatpush1.msra.mxu0 %v389
      %428 = vmatprep.subr.mxu0 %v388
      %429 = vmatpush1.msra.mxu0 %v387
      %430 = vmatprep.subr.mxu0 0.0
      %431 = vmatpush2.msra.mxu0 0.0
      %432 = vmatprep.subr.mxu0 0.0
      %433 = vmatpush2.msra.mxu0 0.0
      %434 = vmatprep.subr.mxu0 0.0
      %435 = vmatpush2.msra.mxu0 0.0
      %436 = vmatprep.subr.mxu0 0.0
      %437 = vmatpush2.msra.mxu0 0.0
      %438 = vmatprep.subr.mxu0 0.0
      %439 = vmatpush2.msra.mxu0 0.0
      %440 = vmatprep.subr.mxu0 0.0
      %441 = vmatpush2.msra.mxu0 0.0
      %442 = vmatprep.subr.mxu0 0.0
      %443 = vmatpush2.msra.mxu0 0.0
      %444 = vmatprep.subr.mxu0 0.0
      %445 = vmatpush2.msra.mxu0 0.0
      %446 = vmatprep.subr.mxu0 0.0
      %447 = vmatpush2.msra.mxu0 0.0
      %448 = vmatprep.subr.mxu0 0.0
      %449 = vmatpush2.msra.mxu0 0.0
      %450 = vmatprep.subr.mxu0 0.0
      %451 = vmatpush2.msra.mxu0 0.0
      %452 = vmatprep.subr.mxu0 0.0
      %453 = vmatpush2.msra.mxu0 0.0
      %454 = vmatprep.subr.mxu0 0.0
      %455 = vmatpush2.msra.mxu0 0.0
      %456 = vmatprep.subr.mxu0 0.0
      %457 = vmatpush2.msra.mxu0 0.0
      %458 = vmatprep.subr.mxu0 0.0
      %459 = vmatpush2.msra.mxu0 0.0
      %460 = vmatprep.subr.mxu0 0.0
      %461 = vmatpush2.msra.mxu0 0.0
      %462 = vmatprep.mubr.f32.mxu0 0.0
      %463 = vmatmul.mubr.f32.gmra.mxu0 %v396
      %v464 = vpop.f32.mrf.mxu0
      %v465 = vadd.f32 %v393, %v464
      %v466 = vpop.f32.mrf.mxu0
      %v467 = vadd.f32 %v393, %v466
      %468 = vdwg.mxu0
      %v469 = vmul.f32 %v465, 0.5
      %v470 = vmul.f32 %v467, 0.5
      %v471 = vmul.f32 %v469, 1.442695
      %v472 = vpow.pop %v471
      %v473 = vmul.f32 %v470, 1.442695
      %v474 = vpow.pop %v473
      %v477 = vcombine.low %v472, %v474
      %v479 = vunpack.c.l.s4 1966171168
      %v480 = vunpack.c.0.s8 %v479
      %v481 = vlaneseq
      %v482 = vshrl.u32 %v481, 7
      %v483 = vsub.s32 %v480, %v482
      %v484 = vrot.slane %v477, %v483
      %v485 = vcombine.high %v484, %v484
      %v487 = vunpack.c.l.s4 1966171168
      %v488 = vunpack.c.0.s8 %v487
      %v489 = vlaneseq
      %v490 = vshrl.u32 %v489, 7
      %v491 = vsub.s32 %v488, %v490
      %v492 = vrot.slane %v485, %v491
      %v494 = vmul.f32 %v245, %v492
      %v496 = vlaneseq
      %v497 = vshrl.u32 %v496, 7
      %v498 = vsub.s32 0, %v497
      %v499 = vrot.slane %v494, %v498
      %v500 = vlaneseq
      %v501 = vshrl.u32 %v500, 7
      %v502 = vsub.s32 1, %v501
      %v503 = vrot.slane %v494, %v502
      %v506 = vadd.f32 %v465, %v499
      %v507 = vadd.f32 %v467, %v503
      %508 = vset.pattern.permute.xlu0 1
      %509 = vperm.xlu0 %508, %v246
      %v510 = vpop.permute.xlu0 %509
      %512 = vset.pattern.permute.xlu0 1
      %513 = vperm.xlu0 %512, %v247
      %v514 = vpop.permute.xlu0 %513
      %v516 = vlaneseq
      %v517 = vshrl.u32 %v516, 7
      %v518 = vsub.s32 0, %v517
      %v519 = vrot.slane %v506, %v518
      %v520 = vlaneseq
      %v521 = vshrl.u32 %v520, 7
      %v522 = vsub.s32 0, %v521
      %v523 = vrot.slane %v507, %v522
      %v524 = vmul.f32 %v510, %v519
      %v525 = vmul.f32 %v510, %v523
      %v526 = vmul.f32 %v514, %v519
      %v527 = vmul.f32 %v514, %v523
      %528 = vset.pattern.permute.xlu0 4
      %529 = vperm.xlu0 %528, %v246
      %v530 = vpop.permute.xlu0 %529
      %532 = vset.pattern.permute.xlu0 4
      %533 = vperm.xlu0 %532, %v247
      %v534 = vpop.permute.xlu0 %533
      %v536 = vadd.f32 %v524, %v530
      %v537 = vadd.f32 %v525, %v530
      %v538 = vadd.f32 %v526, %v534
      %v539 = vadd.f32 %v527, %v534
      %v540 = vmax.f32 %v536, 0.0
      %v541 = vmax.f32 %v537, 0.0
      %v542 = vmax.f32 %v538, 0.0
      %v543 = vmax.f32 %v539, 0.0
      %544 = vset.pattern.permute.xlu0 5
      %545 = vperm.xlu0 %544, %v246
      %v546 = vpop.permute.xlu0 %545
      %548 = vset.pattern.permute.xlu0 5
      %549 = vperm.xlu0 %548, %v247
      %v550 = vpop.permute.xlu0 %549
      %v553 = vsel %vm303, %v251, 0
      %v556 = vsel %vm303, %v252, 0
      %558 = vmatprep.subr.mxu0 0.0
      %559 = vmatpush1.msra.mxu0 0.0
      %560 = vmatprep.subr.mxu0 0.0
      %561 = vmatpush1.msra.mxu0 0.0
      %562 = vmatprep.subr.mxu0 0.0
      %563 = vmatpush1.msra.mxu0 0.0
      %564 = vmatprep.subr.mxu0 0.0
      %565 = vmatpush1.msra.mxu0 0.0
      %566 = vmatprep.subr.mxu0 0.0
      %567 = vmatpush1.msra.mxu0 0.0
      %568 = vmatprep.subr.mxu0 0.0
      %569 = vmatpush1.msra.mxu0 0.0
      %570 = vmatprep.subr.mxu0 0.0
      %571 = vmatpush1.msra.mxu0 0.0
      %572 = vmatprep.subr.mxu0 0.0
      %573 = vmatpush1.msra.mxu0 0.0
      %574 = vmatprep.subr.mxu0 0.0
      %575 = vmatpush1.msra.mxu0 0.0
      %576 = vmatprep.subr.mxu0 0.0
      %577 = vmatpush1.msra.mxu0 0.0
      %578 = vmatprep.subr.mxu0 0.0
      %579 = vmatpush1.msra.mxu0 0.0
      %580 = vmatprep.subr.mxu0 0.0
      %581 = vmatpush1.msra.mxu0 0.0
      %582 = vmatprep.subr.mxu0 0.0
      %583 = vmatpush1.msra.mxu0 0.0
      %584 = vmatprep.subr.mxu0 0.0
      %585 = vmatpush1.msra.mxu0 0.0
      %586 = vmatprep.subr.mxu0 %v543
      %587 = vmatpush1.msra.mxu0 %v542
      %588 = vmatprep.subr.mxu0 %v541
      %589 = vmatpush1.msra.mxu0 %v540
      %590 = vmatprep.subr.mxu0 0.0
      %591 = vmatpush2.msra.mxu0 0.0
      %592 = vmatprep.subr.mxu0 0.0
      %593 = vmatpush2.msra.mxu0 0.0
      %594 = vmatprep.subr.mxu0 0.0
      %595 = vmatpush2.msra.mxu0 0.0
      %596 = vmatprep.subr.mxu0 0.0
      %597 = vmatpush2.msra.mxu0 0.0
      %598 = vmatprep.subr.mxu0 0.0
      %599 = vmatpush2.msra.mxu0 0.0
      %600 = vmatprep.subr.mxu0 0.0
      %601 = vmatpush2.msra.mxu0 0.0
      %602 = vmatprep.subr.mxu0 0.0
      %603 = vmatpush2.msra.mxu0 0.0
      %604 = vmatprep.subr.mxu0 0.0
      %605 = vmatpush2.msra.mxu0 0.0
      %606 = vmatprep.subr.mxu0 0.0
      %607 = vmatpush2.msra.mxu0 0.0
      %608 = vmatprep.subr.mxu0 0.0
      %609 = vmatpush2.msra.mxu0 0.0
      %610 = vmatprep.subr.mxu0 0.0
      %611 = vmatpush2.msra.mxu0 0.0
      %612 = vmatprep.subr.mxu0 0.0
      %613 = vmatpush2.msra.mxu0 0.0
      %614 = vmatprep.subr.mxu0 0.0
      %615 = vmatpush2.msra.mxu0 0.0
      %616 = vmatprep.subr.mxu0 0.0
      %617 = vmatpush2.msra.mxu0 0.0
      %618 = vmatprep.subr.mxu0 0.0
      %619 = vmatpush2.msra.mxu0 0.0
      %620 = vmatprep.subr.mxu0 0.0
      %621 = vmatpush2.msra.mxu0 0.0
      %622 = vmatprep.mubr.f32.mxu0 0.0
      %623 = vmatmul.mubr.f32.gmra.mxu0 %v553
      %v624 = vpop.f32.mrf.mxu0
      %v625 = vadd.f32 %v546, %v624
      %v626 = vpop.f32.mrf.mxu0
      %v627 = vadd.f32 %v546, %v626
      %628 = vmatprep.mubr.f32.mxu0 0.0
      %629 = vmatmul.mubr.f32.gmra.mxu0 %v556
      %v630 = vpop.f32.mrf.mxu0
      %v631 = vadd.f32 %v550, %v630
      %v632 = vpop.f32.mrf.mxu0
      %v633 = vadd.f32 %v550, %v632
      %634 = vdwg.mxu0
      %v635 = vmax.f32 %v625, 0.0
      %v636 = vmax.f32 %v627, 0.0
      %v637 = vmax.f32 %v631, 0.0
      %v638 = vmax.f32 %v633, 0.0
      %v639 = vrot.slane %v253, 2
      %v640 = vrot.slane %v393, 2
      %v642 = vsel %vm303, %v639, 0
      %644 = vmatprep.subr.mxu0 0.0
      %645 = vmatpush1.msra.mxu0 0.0
      %646 = vmatprep.subr.mxu0 0.0
      %647 = vmatpush1.msra.mxu0 0.0
      %648 = vmatprep.subr.mxu0 0.0
      %649 = vmatpush1.msra.mxu0 0.0
      %650 = vmatprep.subr.mxu0 0.0
      %651 = vmatpush1.msra.mxu0 0.0
      %652 = vmatprep.subr.mxu0 0.0
      %653 = vmatpush1.msra.mxu0 0.0
      %654 = vmatprep.subr.mxu0 0.0
      %655 = vmatpush1.msra.mxu0 0.0
      %656 = vmatprep.subr.mxu0 0.0
      %657 = vmatpush1.msra.mxu0 0.0
      %658 = vmatprep.subr.mxu0 0.0
      %659 = vmatpush1.msra.mxu0 0.0
      %660 = vmatprep.subr.mxu0 0.0
      %661 = vmatpush1.msra.mxu0 0.0
      %662 = vmatprep.subr.mxu0 0.0
      %663 = vmatpush1.msra.mxu0 0.0
      %664 = vmatprep.subr.mxu0 0.0
      %665 = vmatpush1.msra.mxu0 0.0
      %666 = vmatprep.subr.mxu0 0.0
      %667 = vmatpush1.msra.mxu0 0.0
      %668 = vmatprep.subr.mxu0 0.0
      %669 = vmatpush1.msra.mxu0 0.0
      %670 = vmatprep.subr.mxu0 0.0
      %671 = vmatpush1.msra.mxu0 0.0
      %672 = vmatprep.subr.mxu0 %v638
      %673 = vmatpush1.msra.mxu0 %v637
      %674 = vmatprep.subr.mxu0 %v636
      %675 = vmatpush1.msra.mxu0 %v635
      %676 = vmatprep.subr.mxu0 0.0
      %677 = vmatpush2.msra.mxu0 0.0
      %678 = vmatprep.subr.mxu0 0.0
      %679 = vmatpush2.msra.mxu0 0.0
      %680 = vmatprep.subr.mxu0 0.0
      %681 = vmatpush2.msra.mxu0 0.0
      %682 = vmatprep.subr.mxu0 0.0
      %683 = vmatpush2.msra.mxu0 0.0
      %684 = vmatprep.subr.mxu0 0.0
      %685 = vmatpush2.msra.mxu0 0.0
      %686 = vmatprep.subr.mxu0 0.0
      %687 = vmatpush2.msra.mxu0 0.0
      %688 = vmatprep.subr.mxu0 0.0
      %689 = vmatpush2.msra.mxu0 0.0
      %690 = vmatprep.subr.mxu0 0.0
      %691 = vmatpush2.msra.mxu0 0.0
      %692 = vmatprep.subr.mxu0 0.0
      %693 = vmatpush2.msra.mxu0 0.0
      %694 = vmatprep.subr.mxu0 0.0
      %695 = vmatpush2.msra.mxu0 0.0
      %696 = vmatprep.subr.mxu0 0.0
      %697 = vmatpush2.msra.mxu0 0.0
      %698 = vmatprep.subr.mxu0 0.0
      %699 = vmatpush2.msra.mxu0 0.0
      %700 = vmatprep.subr.mxu0 0.0
      %701 = vmatpush2.msra.mxu0 0.0
      %702 = vmatprep.subr.mxu0 0.0
      %703 = vmatpush2.msra.mxu0 0.0
      %704 = vmatprep.subr.mxu0 0.0
      %705 = vmatpush2.msra.mxu0 0.0
      %706 = vmatprep.subr.mxu0 0.0
      %707 = vmatpush2.msra.mxu0 0.0
      %708 = vmatprep.mubr.f32.mxu0 0.0
      %709 = vmatmul.mubr.f32.gmra.mxu0 %v642
      %v710 = vpop.f32.mrf.mxu0
      %v711 = vadd.f32 %v640, %v710
      %v712 = vpop.f32.mrf.mxu0
      %v713 = vadd.f32 %v640, %v712
      %714 = vdwg.mxu0
      %v717 = vcombine.low %v711, %v713
      %v719 = vunpack.c.l.s4 1966171168
      %v720 = vunpack.c.0.s8 %v719
      %v721 = vlaneseq
      %v722 = vshrl.u32 %v721, 7
      %v723 = vsub.s32 %v720, %v722
      %v724 = vrot.slane %v717, %v723
      %v726 = vunpack.c.l.s4 1966171168
      %v727 = vunpack.c.0.s8 %v726
      %v728 = vlaneseq
      %v729 = vshrl.u32 %v728, 7
      %v730 = vsub.s32 %v727, %v729
      %v731 = vrot.slane %v724, %v730
      %v733 = vlaneseq
      %vm734 = vcmp.ge.s32.totalorder %v733, 0
      %vm735 = vcmp.lt.s32.totalorder %v733, 256
      %vm736 = vmand %vm734, %vm735
      %737 = vst.msk [vmem:[%s242] ss:$4 sm:$0x3] %vm736, %v731
      %v740 = vcombine.low %v465, %v467
      %v741 = vrot.slane %v740, 7
      %743 = vst [vmem:[%s242] sm:$0x66] %v741
      %s744 = smul.u32 2, %s16
      %p745 = scmp.lt.s32.totalorder %s744, 7
      %s746 = scalar_select %p745, %s744, 7
      %s747 = smul.addr %s746, 4
      %s748 = scalar_lea.vmem %s5, %s747
      // Predicated region
      $region41: #{vae_forward.1} parent=39 // pred_check
        %p749 = pneg %p149
      $region42: #{vae_forward.1} parent=39 // pred_check_branch
        %751 = sbr.rel (%p749) target = $region44
      $region43: #{vae_forward.1} parent=39 // pred_region
        %s752 = smul.u32 2, %s16
      $region44: #{vae_forward.1} parent=39 // pred_fallthru
        _
    $region40: #{vae_forward.1} parent=5 // pred_fallthru
      _
    %p753 = scmp.le.s32.totalorder 2, %s11
    // Predicated region
    $region45: #{vae_forward.1} parent=5 // pred_check
      %p754 = pneg %p753
    $region46: #{vae_forward.1} parent=5 // pred_check_branch
      %756 = sbr.rel (%p754) target = $region48
    $region47: #{vae_forward.1} parent=5 // pred_region
      %s757 = ssub.s32 %s11, 2
      // Predicated region
      $region49: #{vae_forward.1} parent=47 // pred_check
        %p758 = pneg %p155
      $region50: #{vae_forward.1} parent=47 // pred_check_branch
        %760 = sbr.rel (%p758) target = $region52
      $region51: #{vae_forward.1} parent=47 // pred_region
        %s761 = smul.u32 2, %s17
        %p762 = scmp.lt.s32.totalorder %s761, 7
        %s763 = scalar_select %p762, %s761, 7
        %s764 = smul.addr %s763, 4
        %s765 = scalar_lea.vmem %s5, %s764
      $region52: #{vae_forward.1} parent=47 // pred_fallthru
        _
    $region48: #{vae_forward.1} parent=5 // pred_fallthru
      _
  $region6: #{vae_forward.1} parent=0 // loop_footer
    %s15 = sadd.s32 1, %s11
  $region7: #{vae_forward.1} parent=0 // loop_footer_branch
    %10 = sbr.rel target = $region3
  $region8: #{vae_forward.1} parent=0 // loop_exit
    _

</llo_original>
